<compile_context>
chip_gen: v5e
topology: v5e:2x2
jax: 0.10.0
libtpu: 0.0.40
codegen_flags: <defaults>
</compile_context>

<pallas_src>
import jax
import jax.numpy as jnp
from jax import lax
from jax.experimental import pallas as pl
from jax.experimental.pallas import tpu as pltpu


SUB = 256          # rows per inner MXU pass (matches 256x256 MXU on v6e/v7x)
TB_DEFAULT = 1024  # batch-tile rows per grid step (HBM-roofline sweet spot)


def _round_up(n, m):
    return ((n + m - 1) // m) * m


def make_mlp_kernel(sub, n_sub):
    """Build the kernel for a fixed (static) inner sub-tiling configuration."""

    def kernel(x_ref,
               w1_ref, b1_ref,
               w2_ref, b2_ref,
               w3_ref, b3_ref,
               w4_ref, b4_ref,
               o_ref):
        # Weights/biases are VMEM-resident across all batch tiles (constant
        # index_map); load them once per grid step, outside the row loop.
        w1 = w1_ref[...]
        w2 = w2_ref[...]
        w3 = w3_ref[...]
        w4 = w4_ref[...]
        b1 = b1_ref[...]   # (1, N) f32; sublane-broadcast happens in the add
        b2 = b2_ref[...]
        b3 = b3_ref[...]
        b4 = b4_ref[...]

        def compute(r):
            x = x_ref[pl.ds(r, sub), :]                                  # bf16 (sub, IN)

            h = jnp.dot(x, w1, preferred_element_type=jnp.float32) + b1
            # Dropout(p=0.3) eval mode == identity; ReLU done in bf16
            # (bit-identical to f32-max-then-cast; 2x VPU width on v6e/v7x).
            h = jnp.maximum(h.astype(jnp.bfloat16), 0)

            h = jnp.dot(h, w2, preferred_element_type=jnp.float32) + b2
            h = jnp.maximum(h.astype(jnp.bfloat16), 0)

            h = jnp.dot(h, w3, preferred_element_type=jnp.float32) + b3
            h = jnp.maximum(h.astype(jnp.bfloat16), 0)

            y = jnp.dot(h, w4, preferred_element_type=jnp.float32) + b4  # f32 (sub, OUT)
            o_ref[pl.ds(r, sub), :] = y.astype(o_ref.dtype)

        if n_sub == 1:
            compute(0)
        else:
            def body(s, carry):
                compute(pl.multiple_of(s * sub, sub))
                return carry
            # Cap unroll: keeps LLO scheduling visibility without bundle-stream
            # bloat / f32-intermediate vreg blowup.
            lax.fori_loop(0, n_sub, body, 0, unroll=min(4, n_sub))

    return kernel


def network_forward(x, params, *, tb=TB_DEFAULT, out_dtype=jnp.bfloat16):
    """x: (B, in_size) float; params: f32 w1..w4 (in,out) and b1..b4 (1,out)."""
    B, in_size = x.shape
    out_size = params["w4"].shape[1]

    # --- choose batch tiling -------------------------------------------------
    b_pad_min = _round_up(B, 8)           # sublane alignment only
    if b_pad_min <= tb:
        b_pad = b_pad_min
        if b_pad >= 2 * SUB and b_pad % 16 == 0:
            tb_eff = b_pad // 2           # grid of 2 -> both v7x TCs get work
        else:
            tb_eff = b_pad
    else:
        tb_eff = tb
        b_pad = _round_up(B, tb)
    grid_b = b_pad // tb_eff
    sub = SUB if tb_eff % SUB == 0 else tb_eff
    n_sub = tb_eff // sub

    # --- inputs: bf16; feature/output dims left unpadded (block == full dim) -
    xb = x.astype(jnp.bfloat16)
    if b_pad != B:
        xb = jnp.pad(xb, ((0, b_pad - B), (0, 0)))   # fused pad, batch dim only

    w1 = params["w1"].astype(jnp.bfloat16)
    w2 = params["w2"].astype(jnp.bfloat16)
    w3 = params["w3"].astype(jnp.bfloat16)
    w4 = params["w4"].astype(jnp.bfloat16)
    b1 = params["b1"].astype(jnp.float32)
    b2 = params["b2"].astype(jnp.float32)
    b3 = params["b3"].astype(jnp.float32)
    b4 = params["b4"].astype(jnp.float32)

    def resident(a):
        # Same block index every grid step -> stays resident in VMEM.
        return pl.BlockSpec(a.shape, lambda i: (0, 0))

    out_itemsize = jnp.dtype(out_dtype).itemsize
    weight_bytes = (sum(int(w.size) * 2 for w in (w1, w2, w3, w4))
                    + sum(int(b.size) * 4 for b in (b1, b2, b3, b4)))
    cost = pl.CostEstimate(
        flops=2 * b_pad * (in_size * 128 + 128 * 256 + 256 * 128 + 128 * out_size),
        transcendentals=0,
        bytes_accessed=(b_pad * in_size * 2
                        + b_pad * out_size * out_itemsize
                        + weight_bytes),
    )

    out = pl.pallas_call(
        make_mlp_kernel(sub, n_sub),
        out_shape=jax.ShapeDtypeStruct((b_pad, out_size), out_dtype),
        grid_spec=pltpu.PrefetchScalarGridSpec(
            num_scalar_prefetch=0,
            grid=(grid_b,),
            in_specs=[
                pl.BlockSpec((tb_eff, in_size), lambda i: (i, 0)),  # batch-tiled
                resident(w1), resident(b1),
                resident(w2), resident(b2),
                resident(w3), resident(b3),
                resident(w4), resident(b4),
            ],
            out_specs=pl.BlockSpec((tb_eff, out_size), lambda i: (i, 0)),
        ),
        compiler_params=pltpu.CompilerParams(
            dimension_semantics=("parallel",)),
        cost_estimate=cost,
    )(xb, w1, b1, w2, b2, w3, b3, w4, b4)

    return out[:B]


def init_params(key, in_size, out_size):
    """Deterministic init mimicking PyTorch Linear default (uniform +-1/sqrt(fan_in))."""
    dims = [(in_size, 128), (128, 256), (256, 128), (128, out_size)]
    params = {}
    for i, (fan_in, fan_out) in enumerate(dims, start=1):
        key, kw, kb = jax.random.split(key, 3)
        bound = 1.0 / jnp.sqrt(jnp.float32(fan_in))
        params[f"w{i}"] = jax.random.uniform(
            kw, (fan_in, fan_out), jnp.float32, -bound, bound)
        params[f"b{i}"] = jax.random.uniform(
            kb, (1, fan_out), jnp.float32, -bound, bound)
    return params


def ref_forward(x, params):
    """Plain-JAX reference mirroring the kernel's bf16-weight / f32-accum numerics."""
    h = x.astype(jnp.bfloat16).astype(jnp.float32)
    for i in range(1, 5):
        w = params[f"w{i}"].astype(jnp.bfloat16).astype(jnp.float32)
        h = jnp.dot(h, w, precision=lax.Precision.HIGHEST) + params[f"b{i}"]
        if i < 4:
            h = jnp.maximum(h, 0.0).astype(jnp.bfloat16).astype(jnp.float32)
    return h


if __name__ == "__main__":
    key = jax.random.PRNGKey(0)
    k_x, k_p, k_x2 = jax.random.split(key, 3)

    in_size = 32
    out_size = 16
    params = init_params(k_p, in_size, out_size)

    # Small-shape test (single tile, no inner loop).
    batch = 8
    x = jax.random.normal(k_x, (batch, in_size), jnp.float32)
    out = jax.block_until_ready(network_forward(x, params))
    ref = ref_forward(x, params)
    assert out.shape == (batch, out_size)
    err = jnp.max(jnp.abs(out.astype(jnp.float32) - ref))
    assert jnp.allclose(out.astype(jnp.float32), ref, atol=2e-2, rtol=2e-2), float(err)

    # Larger batch: exercises grid=2 ("parallel" axis) + SUB=256 inner loop.
    batch2 = 1024
    x2 = jax.random.normal(k_x2, (batch2, in_size), jnp.float32)
    out2 = jax.block_until_ready(network_forward(x2, params))
    ref2 = ref_forward(x2, params)
    assert out2.shape == (batch2, out_size)
    err2 = jnp.max(jnp.abs(out2.astype(jnp.float32) - ref2))
    assert jnp.allclose(out2.astype(jnp.float32), ref2, atol=2e-2, rtol=2e-2), float(err2)

    print("KERNEL_OK")
</pallas_src>

<mosaic_0001>
module attributes {stable_mosaic.version = 11 : i64} {
  func.func @kernel(%arg0: i32, %arg1: memref<8x32xbf16, #tpu.memory_space<vmem>>, %arg2: memref<32x128xbf16, #tpu.memory_space<vmem>>, %arg3: memref<1x128xf32, #tpu.memory_space<vmem>>, %arg4: memref<128x256xbf16, #tpu.memory_space<vmem>>, %arg5: memref<1x256xf32, #tpu.memory_space<vmem>>, %arg6: memref<256x128xbf16, #tpu.memory_space<vmem>>, %arg7: memref<1x128xf32, #tpu.memory_space<vmem>>, %arg8: memref<128x16xbf16, #tpu.memory_space<vmem>>, %arg9: memref<1x16xf32, #tpu.memory_space<vmem>>, %arg10: memref<8x16xbf16, #tpu.memory_space<vmem>>) attributes {dimension_semantics = [#tpu.dimension_semantics<parallel>], iteration_bounds = array<i64: 1>, scalar_prefetch = 0 : i64, scratch_operands = 0 : i64, tpu.core_type = #tpu.core_type<tc>, window_params = [{transform_indices = @transform_0, window_bounds = array<i64: 8, 32>}, {pipeline_mode = #tpu.pipeline_mode<synchronous>, transform_indices = @transform_1, window_bounds = array<i64: 32, 128>}, {pipeline_mode = #tpu.pipeline_mode<synchronous>, transform_indices = @transform_2, window_bounds = array<i64: 1, 128>}, {pipeline_mode = #tpu.pipeline_mode<synchronous>, transform_indices = @transform_3, window_bounds = array<i64: 128, 256>}, {pipeline_mode = #tpu.pipeline_mode<synchronous>, transform_indices = @transform_4, window_bounds = array<i64: 1, 256>}, {pipeline_mode = #tpu.pipeline_mode<synchronous>, transform_indices = @transform_5, window_bounds = array<i64: 256, 128>}, {pipeline_mode = #tpu.pipeline_mode<synchronous>, transform_indices = @transform_6, window_bounds = array<i64: 1, 128>}, {pipeline_mode = #tpu.pipeline_mode<synchronous>, transform_indices = @transform_7, window_bounds = array<i64: 128, 16>}, {pipeline_mode = #tpu.pipeline_mode<synchronous>, transform_indices = @transform_8, window_bounds = array<i64: 1, 16>}, {transform_indices = @transform_9, window_bounds = array<i64: 8, 16>}]} {
    %c0 = arith.constant 0 : index
    %c0_0 = arith.constant 0 : index
    %0 = vector.load %arg2[%c0, %c0_0] : memref<32x128xbf16, #tpu.memory_space<vmem>>, vector<32x128xbf16>
    %c0_1 = arith.constant 0 : index
    %c0_2 = arith.constant 0 : index
    %1 = vector.load %arg4[%c0_1, %c0_2] : memref<128x256xbf16, #tpu.memory_space<vmem>>, vector<128x256xbf16>
    %c0_3 = arith.constant 0 : index
    %c0_4 = arith.constant 0 : index
    %2 = vector.load %arg6[%c0_3, %c0_4] : memref<256x128xbf16, #tpu.memory_space<vmem>>, vector<256x128xbf16>
    %c0_5 = arith.constant 0 : index
    %c0_6 = arith.constant 0 : index
    %3 = vector.load %arg8[%c0_5, %c0_6] : memref<128x16xbf16, #tpu.memory_space<vmem>>, vector<128x16xbf16>
    %c0_7 = arith.constant 0 : index
    %c0_8 = arith.constant 0 : index
    %4 = vector.load %arg3[%c0_7, %c0_8] : memref<1x128xf32, #tpu.memory_space<vmem>>, vector<1x128xf32>
    %c0_9 = arith.constant 0 : index
    %c0_10 = arith.constant 0 : index
    %5 = vector.load %arg5[%c0_9, %c0_10] : memref<1x256xf32, #tpu.memory_space<vmem>>, vector<1x256xf32>
    %c0_11 = arith.constant 0 : index
    %c0_12 = arith.constant 0 : index
    %6 = vector.load %arg7[%c0_11, %c0_12] : memref<1x128xf32, #tpu.memory_space<vmem>>, vector<1x128xf32>
    %c0_13 = arith.constant 0 : index
    %c0_14 = arith.constant 0 : index
    %7 = vector.load %arg9[%c0_13, %c0_14] : memref<1x16xf32, #tpu.memory_space<vmem>>, vector<1x16xf32>
    %c0_15 = arith.constant 0 : index
    %c0_16 = arith.constant 0 : index
    %8 = vector.load %arg1[%c0_15, %c0_16] : memref<8x32xbf16, #tpu.memory_space<vmem>>, vector<8x32xbf16>
    %cst = arith.constant dense<0.000000e+00> : vector<8x128xf32>
    %9 = tpu.matmul %8, %0, %cst {dimension_numbers = #tpu.dot_dimension_numbers<[1], [0], [0], [1], [0, 0, 1, 1], [], []>} : vector<8x32xbf16>, vector<32x128xbf16>, vector<8x128xf32> -> vector<8x128xf32>
    %10 = vector.broadcast %4 : vector<1x128xf32> to vector<8x128xf32>
    %11 = arith.addf %9, %10 : vector<8x128xf32>
    %12 = arith.truncf %11 : vector<8x128xf32> to vector<8x128xbf16>
    %cst_17 = arith.constant 0.000000e+00 : bf16
    %13 = vector.broadcast %cst_17 : bf16 to vector<8x128xbf16>
    %14 = arith.maximumf %12, %13 : vector<8x128xbf16>
    %cst_18 = arith.constant dense<0.000000e+00> : vector<8x256xf32>
    %15 = tpu.matmul %14, %1, %cst_18 {dimension_numbers = #tpu.dot_dimension_numbers<[1], [0], [0], [1], [0, 0, 1, 1], [], []>} : vector<8x128xbf16>, vector<128x256xbf16>, vector<8x256xf32> -> vector<8x256xf32>
    %16 = vector.broadcast %5 : vector<1x256xf32> to vector<8x256xf32>
    %17 = arith.addf %15, %16 : vector<8x256xf32>
    %18 = arith.truncf %17 : vector<8x256xf32> to vector<8x256xbf16>
    %cst_19 = arith.constant 0.000000e+00 : bf16
    %19 = vector.broadcast %cst_19 : bf16 to vector<8x256xbf16>
    %20 = arith.maximumf %18, %19 : vector<8x256xbf16>
    %cst_20 = arith.constant dense<0.000000e+00> : vector<8x128xf32>
    %21 = tpu.matmul %20, %2, %cst_20 {dimension_numbers = #tpu.dot_dimension_numbers<[1], [0], [0], [1], [0, 0, 1, 1], [], []>} : vector<8x256xbf16>, vector<256x128xbf16>, vector<8x128xf32> -> vector<8x128xf32>
    %22 = vector.broadcast %6 : vector<1x128xf32> to vector<8x128xf32>
    %23 = arith.addf %21, %22 : vector<8x128xf32>
    %24 = arith.truncf %23 : vector<8x128xf32> to vector<8x128xbf16>
    %cst_21 = arith.constant 0.000000e+00 : bf16
    %25 = vector.broadcast %cst_21 : bf16 to vector<8x128xbf16>
    %26 = arith.maximumf %24, %25 : vector<8x128xbf16>
    %cst_22 = arith.constant dense<0.000000e+00> : vector<8x16xf32>
    %27 = tpu.matmul %26, %3, %cst_22 {dimension_numbers = #tpu.dot_dimension_numbers<[1], [0], [0], [1], [0, 0, 1, 1], [], []>} : vector<8x128xbf16>, vector<128x16xbf16>, vector<8x16xf32> -> vector<8x16xf32>
    %28 = vector.broadcast %7 : vector<1x16xf32> to vector<8x16xf32>
    %29 = arith.addf %27, %28 : vector<8x16xf32>
    %30 = arith.truncf %29 : vector<8x16xf32> to vector<8x16xbf16>
    %c0_23 = arith.constant 0 : index
    %c0_24 = arith.constant 0 : index
    %31 = vector.load %arg10[%c0_23, %c0_24] : memref<8x16xbf16, #tpu.memory_space<vmem>>, vector<8x16xbf16>
    tpu.vector_store %arg10[%c0_23, %c0_24], %30 {strides = array<i32>} : memref<8x16xbf16, #tpu.memory_space<vmem>>, vector<8x16xbf16>,
    return
  }
  func.func @transform_0(%arg0: i32) -> (i32, i32) {
    %c0_i32 = arith.constant 0 : i32
    %c0_i32_0 = arith.constant 0 : i32
    return %arg0, %c0_i32 : i32, i32
  }
  func.func @transform_1(%arg0: i32) -> (i32, i32) {
    %c0_i32 = arith.constant 0 : i32
    %c0_i32_0 = arith.constant 0 : i32
    %c0_i32_1 = arith.constant 0 : i32
    return %c0_i32, %c0_i32_0 : i32, i32
  }
  func.func @transform_2(%arg0: i32) -> (i32, i32) {
    %c0_i32 = arith.constant 0 : i32
    %c0_i32_0 = arith.constant 0 : i32
    %c0_i32_1 = arith.constant 0 : i32
    return %c0_i32, %c0_i32_0 : i32, i32
  }
  func.func @transform_3(%arg0: i32) -> (i32, i32) {
    %c0_i32 = arith.constant 0 : i32
    %c0_i32_0 = arith.constant 0 : i32
    %c0_i32_1 = arith.constant 0 : i32
    return %c0_i32, %c0_i32_0 : i32, i32
  }
  func.func @transform_4(%arg0: i32) -> (i32, i32) {
    %c0_i32 = arith.constant 0 : i32
    %c0_i32_0 = arith.constant 0 : i32
    %c0_i32_1 = arith.constant 0 : i32
    return %c0_i32, %c0_i32_0 : i32, i32
  }
  func.func @transform_5(%arg0: i32) -> (i32, i32) {
    %c0_i32 = arith.constant 0 : i32
    %c0_i32_0 = arith.constant 0 : i32
    %c0_i32_1 = arith.constant 0 : i32
    return %c0_i32, %c0_i32_0 : i32, i32
  }
  func.func @transform_6(%arg0: i32) -> (i32, i32) {
    %c0_i32 = arith.constant 0 : i32
    %c0_i32_0 = arith.constant 0 : i32
    %c0_i32_1 = arith.constant 0 : i32
    return %c0_i32, %c0_i32_0 : i32, i32
  }
  func.func @transform_7(%arg0: i32) -> (i32, i32) {
    %c0_i32 = arith.constant 0 : i32
    %c0_i32_0 = arith.constant 0 : i32
    %c0_i32_1 = arith.constant 0 : i32
    return %c0_i32, %c0_i32_0 : i32, i32
  }
  func.func @transform_8(%arg0: i32) -> (i32, i32) {
    %c0_i32 = arith.constant 0 : i32
    %c0_i32_0 = arith.constant 0 : i32
    %c0_i32_1 = arith.constant 0 : i32
    return %c0_i32, %c0_i32_0 : i32, i32
  }
  func.func @transform_9(%arg0: i32) -> (i32, i32) {
    %c0_i32 = arith.constant 0 : i32
    %c0_i32_0 = arith.constant 0 : i32
    return %arg0, %c0_i32 : i32, i32
  }
}

</mosaic_0001>

<llo_original>
// kernel: tpu_custom_call.1
$region0: #{tpu_custom_call.1}
  #allocation0 [shape = 'u32[]', space=smem, size = 0x4, offset = 0x4, fixed_abs, tag = 'smem constant byte address 0x4 - core index']
  #allocation1 [shape = 'u32[72,128]{1,0:T(1,128)}', space=vmem, size = 0x9000, scoped, tag = 'internal scratch']
  %s0 = inlined_call_operand.vmem [shape: bf16[8,32], index: 0, kind: input, shape index: {}]
  %s1 = inlined_call_operand.vmem [shape: bf16[32,128], index: 1, kind: input, shape index: {}]
  %s2 = inlined_call_operand.vmem [shape: f32[1,128], index: 2, kind: input, shape index: {}]
  %s3 = inlined_call_operand.hbm [shape: bf16[128,256], index: 3, kind: input, shape index: {}]
  %s4 = inlined_call_operand.vmem [shape: f32[1,256], index: 4, kind: input, shape index: {}]
  %s5 = inlined_call_operand.hbm [shape: bf16[256,128], index: 5, kind: input, shape index: {}]
  %s6 = inlined_call_operand.vmem [shape: f32[1,128], index: 6, kind: input, shape index: {}]
  %s7 = inlined_call_operand.vmem [shape: bf16[128,16], index: 7, kind: input, shape index: {}]
  %s8 = inlined_call_operand.vmem [shape: f32[1,16], index: 8, kind: input, shape index: {}]
  %s9 = inlined_call_operand.hbm [shape: bf16[8,16], index: 9, kind: output, shape index: {}]
  %s10 = sld [smem:[#allocation0]]
  $region54: #{tpu_custom_call.1} parent=0
    _
  %s12 = ssub.s32 1, %s10
  %s13 = scalar_select 0, %s12, %s10
  $region1: #{tpu_custom_call.1} parent=0
    #allocation2 [shape = 'u8[65536]{0}', space=vmem, size = 0x10000, scoped, tag = 'input window, operand 3, single buffered']
    #allocation3 [shape = 's32[1]{0}', space=sflag, size = 0x4, scoped, tag = 'scoped memory for tpu_custom_call.1']
    #allocation4 [shape = 's32[1]{0}', space=sflag, size = 0x4, scoped, tag = 'scoped memory for tpu_custom_call.1']
    #allocation5 [shape = 'u8[65536]{0}', space=vmem, size = 0x10000, scoped, tag = 'input window, operand 5, single buffered']
    #allocation6 [shape = 's32[1]{0}', space=sflag, size = 0x4, scoped, tag = 'scoped memory for tpu_custom_call.1']
    #allocation7 [shape = 'u8[2048]{0}', space=vmem, size = 0x800, scoped, tag = 'output window, operand 0, single buffered']
    %14 = vsyncpa [#allocation3], 0
    %15 = vsyncpa [#allocation6], 0
    %16 = vsyncpa [#allocation4], 0
    // Predicated region
    $region2: #{tpu_custom_call.1} parent=1 // pred_check
      _
    $region3: #{tpu_custom_call.1} parent=1 // pred_check_branch
      %18 = sbr.rel (0) target = $region5
    $region4: #{tpu_custom_call.1} parent=1 // pred_region
      _
    $region5: #{tpu_custom_call.1} parent=1 // pred_fallthru
      _
    // Predicated region
    $region6: #{tpu_custom_call.1} parent=1 // pred_check
      _
    $region7: #{tpu_custom_call.1} parent=1 // pred_check_branch
      %20 = sbr.rel (0) target = $region9
    $region8: #{tpu_custom_call.1} parent=1 // pred_region
      _
    $region9: #{tpu_custom_call.1} parent=1 // pred_fallthru
      _
    // Predicated region
    $region10: #{tpu_custom_call.1} parent=1 // pred_check
      _
    $region11: #{tpu_custom_call.1} parent=1 // pred_check_branch
      %22 = sbr.rel (0) target = $region13
    $region12: #{tpu_custom_call.1} parent=1 // pred_region
      _
    $region13: #{tpu_custom_call.1} parent=1 // pred_fallthru
      _
    // Predicated region
    $region14: #{tpu_custom_call.1} parent=1 // pred_check
      _
    $region15: #{tpu_custom_call.1} parent=1 // pred_check_branch
      %24 = sbr.rel (0) target = $region17
    $region16: #{tpu_custom_call.1} parent=1 // pred_region
      %26 = vsyncadd [#allocation3], 0
      %s27 = sshll.u32 %s3, 4
      %s28 = int_to_ptr.hbm [resolvable:$true] %s27
      %s29 = sshll.u32 [#allocation2], 4
      %s30 = int_to_ptr.vmem [resolvable:$true] %s29
      %35 = dma.hbm_to_vmem [thread:$0]  %s28, 2048, %s30, [#allocation3], 128, 128, 8
    $region17: #{tpu_custom_call.1} parent=1 // pred_fallthru
      _
    // Predicated region
    $region18: #{tpu_custom_call.1} parent=1 // pred_check
      _
    $region19: #{tpu_custom_call.1} parent=1 // pred_check_branch
      %37 = sbr.rel (0) target = $region21
    $region20: #{tpu_custom_call.1} parent=1 // pred_region
      _
    $region21: #{tpu_custom_call.1} parent=1 // pred_fallthru
      _
    // Predicated region
    $region22: #{tpu_custom_call.1} parent=1 // pred_check
      _
    $region23: #{tpu_custom_call.1} parent=1 // pred_check_branch
      %39 = sbr.rel (0) target = $region25
    $region24: #{tpu_custom_call.1} parent=1 // pred_region
      %41 = vsyncadd [#allocation6], 0
      %s42 = sshll.u32 %s5, 4
      %s43 = int_to_ptr.hbm [resolvable:$true] %s42
      %s44 = sshll.u32 [#allocation5], 4
      %s45 = int_to_ptr.vmem [resolvable:$true] %s44
      %50 = dma.hbm_to_vmem [thread:$0]  %s43, 2048, %s45, [#allocation6], 64, 64, 4
    $region25: #{tpu_custom_call.1} parent=1 // pred_fallthru
      _
    // Predicated region
    $region26: #{tpu_custom_call.1} parent=1 // pred_check
      _
    $region27: #{tpu_custom_call.1} parent=1 // pred_check_branch
      %52 = sbr.rel (0) target = $region29
    $region28: #{tpu_custom_call.1} parent=1 // pred_region
      _
    $region29: #{tpu_custom_call.1} parent=1 // pred_fallthru
      _
    // Predicated region
    $region30: #{tpu_custom_call.1} parent=1 // pred_check
      _
    $region31: #{tpu_custom_call.1} parent=1 // pred_check_branch
      %54 = sbr.rel (0) target = $region33
    $region32: #{tpu_custom_call.1} parent=1 // pred_region
      _
    $region33: #{tpu_custom_call.1} parent=1 // pred_fallthru
      _
    // Predicated region
    $region34: #{tpu_custom_call.1} parent=1 // pred_check
      _
    $region35: #{tpu_custom_call.1} parent=1 // pred_check_branch
      %56 = sbr.rel (0) target = $region37
    $region36: #{tpu_custom_call.1} parent=1 // pred_region
      _
    $region37: #{tpu_custom_call.1} parent=1 // pred_fallthru
      _
    // Predicated region
    $region38: #{tpu_custom_call.1} parent=1 // pred_check
      _
    $region39: #{tpu_custom_call.1} parent=1 // pred_check_branch
      %58 = sbr.rel (0) target = $region41
    $region40: #{tpu_custom_call.1} parent=1 // pred_region
      %60 = dma.done [#allocation3], 2048
    $region41: #{tpu_custom_call.1} parent=1 // pred_fallthru
      _
    // Predicated region
    $region42: #{tpu_custom_call.1} parent=1 // pred_check
      _
    $region43: #{tpu_custom_call.1} parent=1 // pred_check_branch
      %62 = sbr.rel (0) target = $region45
    $region44: #{tpu_custom_call.1} parent=1 // pred_region
      %64 = dma.done [#allocation6], 2048
    $region45: #{tpu_custom_call.1} parent=1 // pred_fallthru
      _
    %v66 = vld [vmem:[%s1] sm:$0xf]
    %v67 = vld [vmem:[%s1 + $0x4] sm:$0xf]
    %v68 = vld [vmem:[%s1 + $0x8] sm:$0xf]
    %v69 = vld [vmem:[%s1 + $0xc] sm:$0xf]
    %v70 = vld [vmem:[#allocation2] sm:$0xff]
    %v71 = vld [vmem:[#allocation2 + $0x8] sm:$0xff]
    %v72 = vld [vmem:[#allocation2 + $0x10] sm:$0xff]
    %v73 = vld [vmem:[#allocation2 + $0x18] sm:$0xff]
    %v74 = vld [vmem:[#allocation2 + $0x20] sm:$0xff]
    %v75 = vld [vmem:[#allocation2 + $0x28] sm:$0xff]
    %v76 = vld [vmem:[#allocation2 + $0x30] sm:$0xff]
    %v77 = vld [vmem:[#allocation2 + $0x38] sm:$0xff]
    %v78 = vld [vmem:[#allocation2 + $0x40] sm:$0xff]
    %v79 = vld [vmem:[#allocation2 + $0x48] sm:$0xff]
    %v80 = vld [vmem:[#allocation2 + $0x50] sm:$0xff]
    %v81 = vld [vmem:[#allocation2 + $0x58] sm:$0xff]
    %v82 = vld [vmem:[#allocation2 + $0x60] sm:$0xff]
    %v83 = vld [vmem:[#allocation2 + $0x68] sm:$0xff]
    %v84 = vld [vmem:[#allocation2 + $0x70] sm:$0xff]
    %v85 = vld [vmem:[#allocation2 + $0x78] sm:$0xff]
    %v86 = vld [vmem:[#allocation5] sm:$0xf]
    %v87 = vld [vmem:[#allocation5 + $0x4] sm:$0xf]
    %v88 = vld [vmem:[#allocation5 + $0x8] sm:$0xf]
    %v89 = vld [vmem:[#allocation5 + $0xc] sm:$0xf]
    %v90 = vld [vmem:[#allocation5 + $0x10] sm:$0xf]
    %v91 = vld [vmem:[#allocation5 + $0x14] sm:$0xf]
    %v92 = vld [vmem:[#allocation5 + $0x18] sm:$0xf]
    %v93 = vld [vmem:[#allocation5 + $0x1c] sm:$0xf]
    %v94 = vld [vmem:[#allocation5 + $0x20] sm:$0xf]
    %v95 = vld [vmem:[#allocation5 + $0x24] sm:$0xf]
    %v96 = vld [vmem:[#allocation5 + $0x28] sm:$0xf]
    %v97 = vld [vmem:[#allocation5 + $0x2c] sm:$0xf]
    %v98 = vld [vmem:[#allocation5 + $0x30] sm:$0xf]
    %v99 = vld [vmem:[#allocation5 + $0x34] sm:$0xf]
    %v100 = vld [vmem:[#allocation5 + $0x38] sm:$0xf]
    %v101 = vld [vmem:[#allocation5 + $0x3c] sm:$0xf]
    %v102 = vld [vmem:[#allocation5 + $0x40] sm:$0xf]
    %v103 = vld [vmem:[#allocation5 + $0x44] sm:$0xf]
    %v104 = vld [vmem:[#allocation5 + $0x48] sm:$0xf]
    %v105 = vld [vmem:[#allocation5 + $0x4c] sm:$0xf]
    %v106 = vld [vmem:[#allocation5 + $0x50] sm:$0xf]
    %v107 = vld [vmem:[#allocation5 + $0x54] sm:$0xf]
    %v108 = vld [vmem:[#allocation5 + $0x58] sm:$0xf]
    %v109 = vld [vmem:[#allocation5 + $0x5c] sm:$0xf]
    %v110 = vld [vmem:[#allocation5 + $0x60] sm:$0xf]
    %v111 = vld [vmem:[#allocation5 + $0x64] sm:$0xf]
    %v112 = vld [vmem:[#allocation5 + $0x68] sm:$0xf]
    %v113 = vld [vmem:[#allocation5 + $0x6c] sm:$0xf]
    %v114 = vld [vmem:[#allocation5 + $0x70] sm:$0xf]
    %v115 = vld [vmem:[#allocation5 + $0x74] sm:$0xf]
    %v116 = vld [vmem:[#allocation5 + $0x78] sm:$0xf]
    %v117 = vld [vmem:[#allocation5 + $0x7c] sm:$0xf]
    %v118 = vld [vmem:[%s7] sm:$0xf]
    %v119 = vld [vmem:[%s7 + $0x4] sm:$0xf]
    %v120 = vld [vmem:[%s7 + $0x8] sm:$0xf]
    %v121 = vld [vmem:[%s7 + $0xc] sm:$0xf]
    %v122 = vld [vmem:[%s7 + $0x10] sm:$0xf]
    %v123 = vld [vmem:[%s7 + $0x14] sm:$0xf]
    %v124 = vld [vmem:[%s7 + $0x18] sm:$0xf]
    %v125 = vld [vmem:[%s7 + $0x1c] sm:$0xf]
    %v126 = vld [vmem:[%s7 + $0x20] sm:$0xf]
    %v127 = vld [vmem:[%s7 + $0x24] sm:$0xf]
    %v128 = vld [vmem:[%s7 + $0x28] sm:$0xf]
    %v129 = vld [vmem:[%s7 + $0x2c] sm:$0xf]
    %v130 = vld [vmem:[%s7 + $0x30] sm:$0xf]
    %v131 = vld [vmem:[%s7 + $0x34] sm:$0xf]
    %v132 = vld [vmem:[%s7 + $0x38] sm:$0xf]
    %v133 = vld [vmem:[%s7 + $0x3c] sm:$0xf]
    %v134 = vld [vmem:[%s2] sm:$0x1]
    %v135 = vld [vmem:[%s4] sm:$0x3]
    %v136 = vld [vmem:[%s6] sm:$0x1]
    %v137 = vld [vmem:[%s8] sm:$0x1]
    %v138 = vld [vmem:[%s0] sm:$0xf]
    %v140 = vperm.slane %v134, 0
    %v146 = vunpack.c.l.b16 %v66
    %v147 = vunpack.c.l.b16 %v67
    %v148 = vunpack.c.l.b16 %v68
    %v149 = vunpack.c.l.b16 %v69
    %v150 = vpack.c.b16 %v147, %v146
    %v151 = vpack.c.b16 %v149, %v148
    %vm154 = vcmask 261120
    %v156 = vsel %vm154, %v138, 0
    %158 = vmatpush.bf16.msra.mxu0 0
    %159 = vmatpush.bf16.msra.mxu0 0
    %160 = vmatpush.bf16.msra.mxu0 0
    %161 = vmatpush.bf16.msra.mxu0 0
    %162 = vmatpush.bf16.msra.mxu0 0
    %163 = vmatpush.bf16.msra.mxu0 0
    %164 = vmatpush.bf16.msra.mxu0 %v151
    %165 = vmatpush.bf16.msra.mxu0 %v150
    %166 = vmatmul.bf16.gmra.mxu0 %v156
    %v167 = vpop.f32.mrf.mxu0
    %v168 = vadd.f32 %v140, %v167
    %v169 = vpop.f32.mrf.mxu0
    %170 = vdwg.mxu0
    %v171 = vpack.c.bf16 %v168, %v168
    %v172 = vunpack.c.l.bf16 %v171
    %v173 = vmax.f32 %v172, 0.0
    %v174 = vpack.c.bf16 %v173, %v173
    %v176 = vperm.slane %v135, 0
    %v177 = vperm.slane %v135, 1
    %v196 = vunpack.c.l.b16 %v70
    %v197 = vunpack.c.h.b16 %v70
    %v198 = vunpack.c.l.b16 %v71
    %v199 = vunpack.c.h.b16 %v71
    %v200 = vunpack.c.l.b16 %v72
    %v201 = vunpack.c.h.b16 %v72
    %v202 = vunpack.c.l.b16 %v73
    %v203 = vunpack.c.h.b16 %v73
    %v204 = vunpack.c.l.b16 %v74
    %v205 = vunpack.c.h.b16 %v74
    %v206 = vunpack.c.l.b16 %v75
    %v207 = vunpack.c.h.b16 %v75
    %v208 = vunpack.c.l.b16 %v76
    %v209 = vunpack.c.h.b16 %v76
    %v210 = vunpack.c.l.b16 %v77
    %v211 = vunpack.c.h.b16 %v77
    %v212 = vunpack.c.l.b16 %v78
    %v213 = vunpack.c.h.b16 %v78
    %v214 = vunpack.c.l.b16 %v79
    %v215 = vunpack.c.h.b16 %v79
    %v216 = vunpack.c.l.b16 %v80
    %v217 = vunpack.c.h.b16 %v80
    %v218 = vunpack.c.l.b16 %v81
    %v219 = vunpack.c.h.b16 %v81
    %v220 = vunpack.c.l.b16 %v82
    %v221 = vunpack.c.h.b16 %v82
    %v222 = vunpack.c.l.b16 %v83
    %v223 = vunpack.c.h.b16 %v83
    %v224 = vunpack.c.l.b16 %v84
    %v225 = vunpack.c.h.b16 %v84
    %v226 = vunpack.c.l.b16 %v85
    %v227 = vunpack.c.h.b16 %v85
    %v228 = vpack.c.b16 %v198, %v196
    %v229 = vpack.c.b16 %v199, %v197
    %v230 = vpack.c.b16 %v202, %v200
    %v231 = vpack.c.b16 %v203, %v201
    %v232 = vpack.c.b16 %v206, %v204
    %v233 = vpack.c.b16 %v207, %v205
    %v234 = vpack.c.b16 %v210, %v208
    %v235 = vpack.c.b16 %v211, %v209
    %v236 = vpack.c.b16 %v214, %v212
    %v237 = vpack.c.b16 %v215, %v213
    %v238 = vpack.c.b16 %v218, %v216
    %v239 = vpack.c.b16 %v219, %v217
    %v240 = vpack.c.b16 %v222, %v220
    %v241 = vpack.c.b16 %v223, %v221
    %v242 = vpack.c.b16 %v226, %v224
    %v243 = vpack.c.b16 %v227, %v225
    %260 = vmatpush.bf16.msra.mxu0 %v242
    %261 = vmatpush.bf16.msra.mxu0 %v240
    %262 = vmatpush.bf16.msra.mxu0 %v238
    %263 = vmatpush.bf16.msra.mxu0 %v236
    %264 = vmatpush.bf16.msra.mxu0 %v234
    %265 = vmatpush.bf16.msra.mxu0 %v232
    %266 = vmatpush.bf16.msra.mxu0 %v230
    %267 = vmatpush.bf16.msra.mxu0 %v228
    %268 = vmatmul.bf16.gmra.mxu0 %v174
    %v269 = vpop.f32.mrf.mxu0
    %v270 = vadd.f32 %v176, %v269
    %v271 = vpop.f32.mrf.mxu0
    %272 = vdwg.mxu0
    %273 = vmatpush.bf16.msra.mxu0 %v243
    %274 = vmatpush.bf16.msra.mxu0 %v241
    %275 = vmatpush.bf16.msra.mxu0 %v239
    %276 = vmatpush.bf16.msra.mxu0 %v237
    %277 = vmatpush.bf16.msra.mxu0 %v235
    %278 = vmatpush.bf16.msra.mxu0 %v233
    %279 = vmatpush.bf16.msra.mxu0 %v231
    %280 = vmatpush.bf16.msra.mxu0 %v229
    %281 = vmatmul.bf16.gmra.mxu0 %v174
    %v282 = vpop.f32.mrf.mxu0
    %v283 = vadd.f32 %v177, %v282
    %v284 = vpop.f32.mrf.mxu0
    %285 = vdwg.mxu0
    %v286 = vpack.c.bf16 %v283, %v270
    %v287 = vunpack.c.l.bf16 %v286
    %v288 = vunpack.c.h.bf16 %v286
    %v289 = vmax.f32 %v287, 0.0
    %v290 = vmax.f32 %v288, 0.0
    %v291 = vpack.c.bf16 %v289, %v289
    %v292 = vpack.c.bf16 %v290, %v290
    %v294 = vperm.slane %v136, 0
    %v328 = vunpack.c.l.b16 %v86
    %v329 = vunpack.c.l.b16 %v87
    %v330 = vunpack.c.l.b16 %v88
    %v331 = vunpack.c.l.b16 %v89
    %v332 = vunpack.c.l.b16 %v90
    %v333 = vunpack.c.l.b16 %v91
    %v334 = vunpack.c.l.b16 %v92
    %v335 = vunpack.c.l.b16 %v93
    %v336 = vunpack.c.l.b16 %v94
    %v337 = vunpack.c.l.b16 %v95
    %v338 = vunpack.c.l.b16 %v96
    %v339 = vunpack.c.l.b16 %v97
    %v340 = vunpack.c.l.b16 %v98
    %v341 = vunpack.c.l.b16 %v99
    %v342 = vunpack.c.l.b16 %v100
    %v343 = vunpack.c.l.b16 %v101
    %v344 = vunpack.c.l.b16 %v102
    %v345 = vunpack.c.l.b16 %v103
    %v346 = vunpack.c.l.b16 %v104
    %v347 = vunpack.c.l.b16 %v105
    %v348 = vunpack.c.l.b16 %v106
    %v349 = vunpack.c.l.b16 %v107
    %v350 = vunpack.c.l.b16 %v108
    %v351 = vunpack.c.l.b16 %v109
    %v352 = vunpack.c.l.b16 %v110
    %v353 = vunpack.c.l.b16 %v111
    %v354 = vunpack.c.l.b16 %v112
    %v355 = vunpack.c.l.b16 %v113
    %v356 = vunpack.c.l.b16 %v114
    %v357 = vunpack.c.l.b16 %v115
    %v358 = vunpack.c.l.b16 %v116
    %v359 = vunpack.c.l.b16 %v117
    %v360 = vpack.c.b16 %v329, %v328
    %v361 = vpack.c.b16 %v331, %v330
    %v362 = vpack.c.b16 %v333, %v332
    %v363 = vpack.c.b16 %v335, %v334
    %v364 = vpack.c.b16 %v337, %v336
    %v365 = vpack.c.b16 %v339, %v338
    %v366 = vpack.c.b16 %v341, %v340
    %v367 = vpack.c.b16 %v343, %v342
    %v368 = vpack.c.b16 %v345, %v344
    %v369 = vpack.c.b16 %v347, %v346
    %v370 = vpack.c.b16 %v349, %v348
    %v371 = vpack.c.b16 %v351, %v350
    %v372 = vpack.c.b16 %v353, %v352
    %v373 = vpack.c.b16 %v355, %v354
    %v374 = vpack.c.b16 %v357, %v356
    %v375 = vpack.c.b16 %v359, %v358
    %392 = vmatpush.bf16.msra.mxu0 %v367
    %393 = vmatpush.bf16.msra.mxu0 %v366
    %394 = vmatpush.bf16.msra.mxu0 %v365
    %395 = vmatpush.bf16.msra.mxu0 %v364
    %396 = vmatpush.bf16.msra.mxu0 %v363
    %397 = vmatpush.bf16.msra.mxu0 %v362
    %398 = vmatpush.bf16.msra.mxu0 %v361
    %399 = vmatpush.bf16.msra.mxu0 %v360
    %400 = vmatmul.bf16.gmra.mxu0 %v291
    %v401 = vpop.f32.mrf.mxu0
    %v402 = vadd.f32 %v294, %v401
    %v403 = vpop.f32.mrf.mxu0
    %404 = vdwg.mxu0
    %405 = vmatpush.bf16.msra.mxu0 %v375
    %406 = vmatpush.bf16.msra.mxu0 %v374
    %407 = vmatpush.bf16.msra.mxu0 %v373
    %408 = vmatpush.bf16.msra.mxu0 %v372
    %409 = vmatpush.bf16.msra.mxu0 %v371
    %410 = vmatpush.bf16.msra.mxu0 %v370
    %411 = vmatpush.bf16.msra.mxu0 %v369
    %412 = vmatpush.bf16.msra.mxu0 %v368
    %413 = vmatmul.bf16.gmra.mxu0 %v292
    %v414 = vpop.f32.mrf.mxu0
    %v415 = vadd.f32 %v402, %v414
    %v416 = vpop.f32.mrf.mxu0
    %417 = vdwg.mxu0
    %v418 = vpack.c.bf16 %v415, %v415
    %v419 = vunpack.c.l.bf16 %v418
    %v420 = vmax.f32 %v419, 0.0
    %v421 = vpack.c.bf16 %v420, %v420
    %v423 = vperm.slane %v137, 0
    %v441 = vunpack.c.l.b16 %v118
    %v442 = vunpack.c.l.b16 %v119
    %v443 = vunpack.c.l.b16 %v120
    %v444 = vunpack.c.l.b16 %v121
    %v445 = vunpack.c.l.b16 %v122
    %v446 = vunpack.c.l.b16 %v123
    %v447 = vunpack.c.l.b16 %v124
    %v448 = vunpack.c.l.b16 %v125
    %v449 = vunpack.c.l.b16 %v126
    %v450 = vunpack.c.l.b16 %v127
    %v451 = vunpack.c.l.b16 %v128
    %v452 = vunpack.c.l.b16 %v129
    %v453 = vunpack.c.l.b16 %v130
    %v454 = vunpack.c.l.b16 %v131
    %v455 = vunpack.c.l.b16 %v132
    %v456 = vunpack.c.l.b16 %v133
    %v457 = vpack.c.b16 %v442, %v441
    %v458 = vpack.c.b16 %v444, %v443
    %v459 = vpack.c.b16 %v446, %v445
    %v460 = vpack.c.b16 %v448, %v447
    %v461 = vpack.c.b16 %v450, %v449
    %v462 = vpack.c.b16 %v452, %v451
    %v463 = vpack.c.b16 %v454, %v453
    %v464 = vpack.c.b16 %v456, %v455
    %473 = vmatpush.bf16.msra.mxu0 %v464
    %474 = vmatpush.bf16.msra.mxu0 %v463
    %475 = vmatpush.bf16.msra.mxu0 %v462
    %476 = vmatpush.bf16.msra.mxu0 %v461
    %477 = vmatpush.bf16.msra.mxu0 %v460
    %478 = vmatpush.bf16.msra.mxu0 %v459
    %479 = vmatpush.bf16.msra.mxu0 %v458
    %480 = vmatpush.bf16.msra.mxu0 %v457
    %481 = vmatmul.bf16.gmra.mxu0 %v421
    %v482 = vpop.f32.mrf.mxu0
    %v483 = vadd.f32 %v423, %v482
    %v484 = vpop.f32.mrf.mxu0
    %485 = vdwg.mxu0
    %v486 = vpack.c.bf16 %v483, %v483
    %vm487 = vcmask 125952
    %488 = vst.msk [vmem:[#allocation7] sm:$0xf] %vm487, %v486
    // Predicated region
    $region46: #{tpu_custom_call.1} parent=1 // pred_check
      _
    $region47: #{tpu_custom_call.1} parent=1 // pred_check_branch
      %490 = sbr.rel (0) target = $region49
    $region48: #{tpu_custom_call.1} parent=1 // pred_region
      %492 = vsyncadd [#allocation4], 0
      %s494 = sshll.u32 [#allocation7], 4
      %s495 = int_to_ptr.vmem [resolvable:$true] %s494
      %s496 = sshll.u32 %s9, 4
      %s497 = int_to_ptr.hbm [resolvable:$true] %s496
      %499 = dma.vmem_to_hbm [thread:$0]  %s495, 64, %s497, [#allocation4]
    $region49: #{tpu_custom_call.1} parent=1 // pred_fallthru
      _
    // Predicated region
    $region50: #{tpu_custom_call.1} parent=1 // pred_check
      _
    $region51: #{tpu_custom_call.1} parent=1 // pred_check_branch
      %501 = sbr.rel (0) target = $region53
    $region52: #{tpu_custom_call.1} parent=1 // pred_region
      %503 = dma.done [#allocation4], 64
    $region53: #{tpu_custom_call.1} parent=1 // pred_fallthru
      _
    %504 = vsyncpa [#allocation3], 1
    %505 = vsyncpa [#allocation6], 1
    %506 = vsyncpa [#allocation4], 1

</llo_original>
